<compile_context>
chip_gen: v7x
topology: tpu7x:2x2x1
jax: 0.10.0
libtpu: 0.0.40
codegen_flags: <defaults>
</compile_context>

<pallas_src>
import jax
import jax.numpy as jnp
from jax.experimental import pallas as pl
from jax.experimental.pallas import tpu as pltpu


def _cdiv(a, b):
    return -(-a // b)


def _round_up(x, m):
    return _cdiv(x, m) * m


def _device_kind():
    try:
        return jax.devices()[0].device_kind.lower()
    except Exception:
        return ""


def deepant_kernel(x_ref, a1_ref, b1_ref, a2_ref, b2_ref,
                   wl1_ref, bl1_ref, wl2_ref, bl2_ref, o_ref):
    n1 = b1_ref.shape[-1]          # padded pooled conv1 feature count (mult of 128)
    n2 = b2_ref.shape[-1]          # padded pooled conv2 feature count (mult of 128)

    # f32 DMA + in-kernel bf16 cast (free VPU filler under the MXU) instead of a
    # separate convert HLO that doubles input HBM traffic.
    x = x_ref[...].astype(a1_ref.dtype)                                   # (B_BLK, Fin) bf16

    # Conv1 (padding + both taps folded into a1) -> even/odd halves (128-aligned
    # lane slices) -> max-pool -> bias -> ReLU.
    z1 = jnp.dot(x, a1_ref[...], preferred_element_type=jnp.float32)      # (B_BLK, 2*n1) f32
    p1 = jnp.maximum(jnp.maximum(z1[:, :n1], z1[:, n1:]) + b1_ref[...], 0.0)

    # Conv2 + ReLU + MaxPool2, same trick.
    z2 = jnp.dot(p1.astype(a2_ref.dtype), a2_ref[...],
                 preferred_element_type=jnp.float32)                      # (B_BLK, 2*n2) f32
    p2 = jnp.maximum(jnp.maximum(z2[:, :n2], z2[:, n2:]) + b2_ref[...], 0.0)

    # MLP: Linear(F,F) + ReLU + Linear(F, nb_dim); p2 already has torch Flatten order.
    h = jnp.maximum(jnp.dot(p2.astype(wl1_ref.dtype), wl1_ref[...],
                            preferred_element_type=jnp.float32) + bl1_ref[...], 0.0)
    # TODO(synk): nn.Dropout(p=0.3) path (add_dropout=True) not implemented; module default is Identity.
    out = jnp.dot(h.astype(wl2_ref.dtype), wl2_ref[...],
                  preferred_element_type=jnp.float32) + bl2_ref[...]
    o_ref[...] = out.astype(o_ref.dtype)                                  # lane-dense (128-mult) store


def _conv1d_as_dense(w, l_in, pad=1):
    """Dense matrix of Conv1d(C_in->C_out, K, stride=1, padding=pad) acting on
    channel-major flattened features: (C_in*l_in) -> (C_out*l_out)."""
    c_out, c_in, K = w.shape
    l_out = l_in + 2 * pad - K + 1
    l = jnp.arange(l_in)
    t = jnp.arange(l_out)
    k = jnp.arange(K)
    # sel[l, t, k] == 1  iff input position l feeds output position t through tap k
    sel = (l[:, None, None] == (t[None, :, None] + k[None, None, :] - pad)).astype(w.dtype)
    m = jnp.einsum('ltk,ock->clot', sel, w)
    return m.reshape(c_in * l_in, c_out * l_out), l_out


def _fold_pool(m, b, c_out, l_out, lane=128):
    """Reorder conv columns into [even-time | odd-time] MaxPool1d(2) pairs
    (trailing odd column dropped, matching torch), and zero-pad each half (and
    the bias row) up to a multiple of `lane` so slices stay lane-aligned.
    Returns (folded_matrix, bias_row, pooled_len, n_real, n_padded)."""
    l_pool = l_out // 2
    n = c_out * l_pool
    n_pad = _round_up(n, lane)
    cols = (jnp.arange(c_out)[:, None] * l_out + 2 * jnp.arange(l_pool)[None, :]).reshape(-1)
    m_even = m[:, cols]
    m_odd = m[:, cols + 1]
    b_rep = jnp.repeat(b, l_pool)                              # bias index: o*l_pool + s
    if n_pad != n:
        zp = jnp.zeros((m.shape[0], n_pad - n), m.dtype)
        m_even = jnp.concatenate([m_even, zp], axis=1)
        m_odd = jnp.concatenate([m_odd, zp], axis=1)
        b_rep = jnp.concatenate([b_rep, jnp.zeros((n_pad - n,), b.dtype)])
    return jnp.concatenate([m_even, m_odd], axis=1), b_rep[None, :], l_pool, n, n_pad


def _choose_blocking(batch, block_b, num_tc):
    """Adaptive batch block: pad at most one 128-row tile per step; on multi-TC
    chips ensure several grid steps so the parallel axis shards across cores."""
    n_steps = max(1, _cdiv(batch, block_b))
    if num_tc > 1:
        n_steps = max(n_steps, min(2 * num_tc, _cdiv(batch, 128)))
    b_blk = _round_up(_cdiv(batch, n_steps), 128)
    n_steps = _cdiv(batch, b_blk)
    return b_blk, n_steps


def deepant_forward(x, params, block_b=1024):
    """x: (B, len_window, nb_dimensions) float32 (same NCL convention as torch)."""
    B, c_in, L = x.shape
    w1, b1, w2, b2, wlin1, blin1, wlin2, blin2 = params
    nb_dim = wlin2.shape[1]
    mm = jnp.bfloat16                                          # matmul operand dtype (f32 accumulate)

    # --- Fold conv taps + zero padding + pool selection into dense matrices,
    #     padding every feature width to a 128-lane multiple (built once per call).
    fin = c_in * L
    fin_pad = _round_up(fin, 128)

    m1, l1c = _conv1d_as_dense(w1, L)                          # (fin, 32*l1c)
    a1, b1r, l1o, n1, n1p = _fold_pool(m1, b1, w1.shape[0], l1c)
    if fin_pad != fin:
        a1 = jnp.pad(a1, ((0, fin_pad - fin), (0, 0)))

    m2, l2c = _conv1d_as_dense(w2, l1o)                        # (n1, 32*l2c)
    a2, b2r, l2o, n2, n2p = _fold_pool(m2, b2, w2.shape[0], l2c)
    if n1p != n1:
        a2 = jnp.pad(a2, ((0, n1p - n1), (0, 0)))

    F = n2                                                     # torch: 32 * l2o
    Fp = n2p
    n_out_pad = _round_up(nb_dim, 128)
    wl1p = jnp.pad(wlin1, ((0, Fp - F), (0, Fp - F)))
    bl1r = jnp.pad(blin1, (0, Fp - F))[None, :]
    wl2p = jnp.pad(wlin2, ((0, Fp - F), (0, n_out_pad - nb_dim)))
    bl2r = jnp.pad(blin2, (0, n_out_pad - nb_dim))[None, :]

    # --- Batch folding: samples become rows (M dim) of every matmul.
    kind = _device_kind()
    num_tc = 2 if "v7" in kind else 1
    b_blk, n_steps = _choose_blocking(B, block_b, num_tc)
    b_pad = b_blk * n_steps

    x_flat = x.reshape(B, fin)                                 # feature index = c*L + l; stays f32
    if b_pad != B or fin_pad != fin:
        x_flat = jnp.pad(x_flat, ((0, b_pad - B), (0, fin_pad - fin)))

    param_ops = [a1.astype(mm), b1r, a2.astype(mm), b2r,
                 wl1p.astype(mm), bl1r, wl2p.astype(mm), bl2r]

    def full_spec(a):
        # Grid-invariant weights/biases: constant index_map -> DMA'd once.
        # (pipeline_mode=pl.Buffered(1) would drop the second buffer, but the
        #  default is portable and cheap at these sizes.)
        return pl.BlockSpec(a.shape, lambda i: (0, 0))

    flops = 2 * b_pad * (fin_pad * 2 * n1p + n1p * 2 * n2p + n2p * Fp + Fp * n_out_pad)
    param_bytes = sum(int(p.size) * p.dtype.itemsize for p in param_ops)
    bytes_accessed = b_pad * fin_pad * 4 + param_bytes + b_pad * n_out_pad * 4

    # Rough per-step VMEM footprint: double-buffered x/out blocks, resident
    # (double-buffered) weights, bf16 x copy and f32 intermediates.
    vmem_est = (2 * b_blk * fin_pad * 4 + 2 * b_blk * n_out_pad * 4 + 2 * param_bytes
                + b_blk * (fin_pad * 2 + (3 * n1p + 3 * n2p + Fp) * 4))
    compiler_kwargs = dict(dimension_semantics=("parallel",))
    if vmem_est > 12 * 1024 * 1024:           # above v5e's 16 MiB scoped default (w/ headroom)
        cap = (56 if "v7" in kind else 100) * 1024 * 1024
        compiler_kwargs["vmem_limit_bytes"] = int(
            min(max(vmem_est * 5 // 4, 32 * 1024 * 1024), cap))

    out = pl.pallas_call(
        deepant_kernel,
        out_shape=jax.ShapeDtypeStruct((b_pad, n_out_pad), jnp.float32),
        grid=(n_steps,),
        in_specs=[pl.BlockSpec((b_blk, fin_pad), lambda i: (i, 0))]
                 + [full_spec(a) for a in param_ops],
        out_specs=pl.BlockSpec((b_blk, n_out_pad), lambda i: (i, 0)),
        compiler_params=pltpu.CompilerParams(**compiler_kwargs),
        cost_estimate=pl.CostEstimate(flops=int(flops), transcendentals=0,
                                      bytes_accessed=int(bytes_accessed)),
    )(x_flat, *param_ops)
    return out[:B, :nb_dim]


def deepant_reference(x, params):
    """Pure-JAX f32 reference, faithful to the torch NCL forward."""
    w1, b1, w2, b2, wlin1, blin1, wlin2, blin2 = params
    hp = jax.lax.Precision.HIGHEST

    def conv_relu_pool(inp, w, b):
        xp = jnp.pad(inp, ((0, 0), (0, 0), (1, 1)))
        y = (jnp.einsum('oc,bct->bot', w[:, :, 0], xp[:, :, :-1], precision=hp)
             + jnp.einsum('oc,bct->bot', w[:, :, 1], xp[:, :, 1:], precision=hp)
             + b[None, :, None])
        y = jnp.maximum(y, 0.0)
        lo = y.shape[-1] // 2
        y = y[:, :, :2 * lo]
        return jnp.max(y.reshape(y.shape[0], y.shape[1], lo, 2), axis=-1)

    h = conv_relu_pool(x, w1, b1)
    h = conv_relu_pool(h, w2, b2)
    flat = h.reshape(h.shape[0], -1)
    z = jnp.maximum(jnp.dot(flat, wlin1, precision=hp) + blin1, 0.0)
    return jnp.dot(z, wlin2, precision=hp) + blin2


def init_params(key, len_window, nb_dim):
    L = nb_dim
    l1o = (L + 1) // 2
    l2o = (l1o + 1) // 2
    F = 32 * l2o
    ks = jax.random.split(key, 8)
    w1 = jax.random.normal(ks[0], (32, len_window, 2), jnp.float32) * 0.1
    b1 = jax.random.normal(ks[1], (32,), jnp.float32) * 0.1
    w2 = jax.random.normal(ks[2], (32, 32, 2), jnp.float32) * 0.1
    b2 = jax.random.normal(ks[3], (32,), jnp.float32) * 0.1
    wlin1 = jax.random.normal(ks[4], (F, F), jnp.float32) * 0.05
    blin1 = jax.random.normal(ks[5], (F,), jnp.float32) * 0.1
    wlin2 = jax.random.normal(ks[6], (F, nb_dim), jnp.float32) * 0.05
    blin2 = jax.random.normal(ks[7], (nb_dim,), jnp.float32) * 0.1
    return (w1, b1, w2, b2, wlin1, blin1, wlin2, blin2)


if __name__ == "__main__":
    batch, len_window, nb_dim = 2, 8, 16       # x: (B, len_window, nb_dimensions)
    key = jax.random.PRNGKey(0)
    kx, kp = jax.random.split(key)
    x = jax.random.normal(kx, (batch, len_window, nb_dim), jnp.float32)
    params = init_params(kp, len_window, nb_dim)

    fwd = jax.jit(deepant_forward)
    out = jax.block_until_ready(fwd(x, params))
    ref = jax.block_until_ready(deepant_reference(x, params))

    assert out.shape == (batch, nb_dim), out.shape
    err = float(jnp.max(jnp.abs(out - ref)))
    # bf16 matmul operands vs f32 reference -> relaxed tolerance.
    assert jnp.allclose(out, ref, atol=5e-2, rtol=5e-2), f"max abs err {err}"
    print("KERNEL_OK")
</pallas_src>

<mosaic_0001>
module attributes {stable_mosaic.version = 11 : i64} {
  func.func @deepant_kernel(%arg0: i32, %arg1: memref<128x128xf32, #tpu.memory_space<vmem>>, %arg2: memref<128x512xbf16, #tpu.memory_space<vmem>>, %arg3: memref<1x256xf32, #tpu.memory_space<vmem>>, %arg4: memref<256x256xbf16, #tpu.memory_space<vmem>>, %arg5: memref<1x128xf32, #tpu.memory_space<vmem>>, %arg6: memref<128x128xbf16, #tpu.memory_space<vmem>>, %arg7: memref<1x128xf32, #tpu.memory_space<vmem>>, %arg8: memref<128x128xbf16, #tpu.memory_space<vmem>>, %arg9: memref<1x128xf32, #tpu.memory_space<vmem>>, %arg10: memref<128x128xf32, #tpu.memory_space<vmem>>) attributes {dimension_semantics = [#tpu.dimension_semantics<parallel>], iteration_bounds = array<i64: 1>, scalar_prefetch = 0 : i64, scratch_operands = 0 : i64, tpu.core_type = #tpu.core_type<tc>, window_params = [{transform_indices = @transform_0, window_bounds = array<i64: 128, 128>}, {pipeline_mode = #tpu.pipeline_mode<synchronous>, transform_indices = @transform_1, window_bounds = array<i64: 128, 512>}, {pipeline_mode = #tpu.pipeline_mode<synchronous>, transform_indices = @transform_2, window_bounds = array<i64: 1, 256>}, {pipeline_mode = #tpu.pipeline_mode<synchronous>, transform_indices = @transform_3, window_bounds = array<i64: 256, 256>}, {pipeline_mode = #tpu.pipeline_mode<synchronous>, transform_indices = @transform_4, window_bounds = array<i64: 1, 128>}, {pipeline_mode = #tpu.pipeline_mode<synchronous>, transform_indices = @transform_5, window_bounds = array<i64: 128, 128>}, {pipeline_mode = #tpu.pipeline_mode<synchronous>, transform_indices = @transform_6, window_bounds = array<i64: 1, 128>}, {pipeline_mode = #tpu.pipeline_mode<synchronous>, transform_indices = @transform_7, window_bounds = array<i64: 128, 128>}, {pipeline_mode = #tpu.pipeline_mode<synchronous>, transform_indices = @transform_8, window_bounds = array<i64: 1, 128>}, {transform_indices = @transform_9, window_bounds = array<i64: 128, 128>}]} {
    %c0 = arith.constant 0 : index
    %c0_0 = arith.constant 0 : index
    %0 = vector.load %arg1[%c0, %c0_0] : memref<128x128xf32, #tpu.memory_space<vmem>>, vector<128x128xf32>
    %1 = arith.truncf %0 : vector<128x128xf32> to vector<128x128xbf16>
    %c0_1 = arith.constant 0 : index
    %c0_2 = arith.constant 0 : index
    %2 = vector.load %arg2[%c0_1, %c0_2] : memref<128x512xbf16, #tpu.memory_space<vmem>>, vector<128x512xbf16>
    %cst = arith.constant dense<0.000000e+00> : vector<128x512xf32>
    %3 = tpu.matmul %1, %2, %cst {dimension_numbers = #tpu.dot_dimension_numbers<[1], [0], [0], [1], [0, 0, 1, 1], [], []>} : vector<128x128xbf16>, vector<128x512xbf16>, vector<128x512xf32> -> vector<128x512xf32>
    %4 = vector.extract_strided_slice %3 {offsets = [0, 0], sizes = [128, 256], strides = [1, 1]} : vector<128x512xf32> to vector<128x256xf32>
    %5 = vector.extract_strided_slice %3 {offsets = [0, 256], sizes = [128, 256], strides = [1, 1]} : vector<128x512xf32> to vector<128x256xf32>
    %6 = arith.maximumf %4, %5 : vector<128x256xf32>
    %c0_3 = arith.constant 0 : index
    %c0_4 = arith.constant 0 : index
    %7 = vector.load %arg3[%c0_3, %c0_4] : memref<1x256xf32, #tpu.memory_space<vmem>>, vector<1x256xf32>
    %8 = vector.broadcast %7 : vector<1x256xf32> to vector<128x256xf32>
    %9 = arith.addf %6, %8 : vector<128x256xf32>
    %cst_5 = arith.constant 0.000000e+00 : f32
    %10 = vector.broadcast %cst_5 : f32 to vector<128x256xf32>
    %11 = arith.maximumf %9, %10 : vector<128x256xf32>
    %12 = arith.truncf %11 : vector<128x256xf32> to vector<128x256xbf16>
    %c0_6 = arith.constant 0 : index
    %c0_7 = arith.constant 0 : index
    %13 = vector.load %arg4[%c0_6, %c0_7] : memref<256x256xbf16, #tpu.memory_space<vmem>>, vector<256x256xbf16>
    %cst_8 = arith.constant dense<0.000000e+00> : vector<128x256xf32>
    %14 = tpu.matmul %12, %13, %cst_8 {dimension_numbers = #tpu.dot_dimension_numbers<[1], [0], [0], [1], [0, 0, 1, 1], [], []>} : vector<128x256xbf16>, vector<256x256xbf16>, vector<128x256xf32> -> vector<128x256xf32>
    %15 = vector.extract_strided_slice %14 {offsets = [0, 0], sizes = [128, 128], strides = [1, 1]} : vector<128x256xf32> to vector<128x128xf32>
    %16 = vector.extract_strided_slice %14 {offsets = [0, 128], sizes = [128, 128], strides = [1, 1]} : vector<128x256xf32> to vector<128x128xf32>
    %17 = arith.maximumf %15, %16 : vector<128x128xf32>
    %c0_9 = arith.constant 0 : index
    %c0_10 = arith.constant 0 : index
    %18 = vector.load %arg5[%c0_9, %c0_10] : memref<1x128xf32, #tpu.memory_space<vmem>>, vector<1x128xf32>
    %19 = vector.broadcast %18 : vector<1x128xf32> to vector<128x128xf32>
    %20 = arith.addf %17, %19 : vector<128x128xf32>
    %cst_11 = arith.constant 0.000000e+00 : f32
    %21 = vector.broadcast %cst_11 : f32 to vector<128x128xf32>
    %22 = arith.maximumf %20, %21 : vector<128x128xf32>
    %23 = arith.truncf %22 : vector<128x128xf32> to vector<128x128xbf16>
    %c0_12 = arith.constant 0 : index
    %c0_13 = arith.constant 0 : index
    %24 = vector.load %arg6[%c0_12, %c0_13] : memref<128x128xbf16, #tpu.memory_space<vmem>>, vector<128x128xbf16>
    %cst_14 = arith.constant dense<0.000000e+00> : vector<128x128xf32>
    %25 = tpu.matmul %23, %24, %cst_14 {dimension_numbers = #tpu.dot_dimension_numbers<[1], [0], [0], [1], [0, 0, 1, 1], [], []>} : vector<128x128xbf16>, vector<128x128xbf16>, vector<128x128xf32> -> vector<128x128xf32>
    %c0_15 = arith.constant 0 : index
    %c0_16 = arith.constant 0 : index
    %26 = vector.load %arg7[%c0_15, %c0_16] : memref<1x128xf32, #tpu.memory_space<vmem>>, vector<1x128xf32>
    %27 = vector.broadcast %26 : vector<1x128xf32> to vector<128x128xf32>
    %28 = arith.addf %25, %27 : vector<128x128xf32>
    %cst_17 = arith.constant 0.000000e+00 : f32
    %29 = vector.broadcast %cst_17 : f32 to vector<128x128xf32>
    %30 = arith.maximumf %28, %29 : vector<128x128xf32>
    %31 = arith.truncf %30 : vector<128x128xf32> to vector<128x128xbf16>
    %c0_18 = arith.constant 0 : index
    %c0_19 = arith.constant 0 : index
    %32 = vector.load %arg8[%c0_18, %c0_19] : memref<128x128xbf16, #tpu.memory_space<vmem>>, vector<128x128xbf16>
    %cst_20 = arith.constant dense<0.000000e+00> : vector<128x128xf32>
    %33 = tpu.matmul %31, %32, %cst_20 {dimension_numbers = #tpu.dot_dimension_numbers<[1], [0], [0], [1], [0, 0, 1, 1], [], []>} : vector<128x128xbf16>, vector<128x128xbf16>, vector<128x128xf32> -> vector<128x128xf32>
    %c0_21 = arith.constant 0 : index
    %c0_22 = arith.constant 0 : index
    %34 = vector.load %arg9[%c0_21, %c0_22] : memref<1x128xf32, #tpu.memory_space<vmem>>, vector<1x128xf32>
    %35 = vector.broadcast %34 : vector<1x128xf32> to vector<128x128xf32>
    %36 = arith.addf %33, %35 : vector<128x128xf32>
    %c0_23 = arith.constant 0 : index
    %c0_24 = arith.constant 0 : index
    %37 = vector.load %arg10[%c0_23, %c0_24] : memref<128x128xf32, #tpu.memory_space<vmem>>, vector<128x128xf32>
    tpu.vector_store %arg10[%c0_23, %c0_24], %36 {strides = array<i32>} : memref<128x128xf32, #tpu.memory_space<vmem>>, vector<128x128xf32>,
    return
  }
  func.func @transform_0(%arg0: i32) -> (i32, i32) {
    %c0_i32 = arith.constant 0 : i32
    %c0_i32_0 = arith.constant 0 : i32
    return %arg0, %c0_i32 : i32, i32
  }
  func.func @transform_1(%arg0: i32) -> (i32, i32) {
    %c0_i32 = arith.constant 0 : i32
    %c0_i32_0 = arith.constant 0 : i32
    %c0_i32_1 = arith.constant 0 : i32
    return %c0_i32, %c0_i32_0 : i32, i32
  }
  func.func @transform_2(%arg0: i32) -> (i32, i32) {
    %c0_i32 = arith.constant 0 : i32
    %c0_i32_0 = arith.constant 0 : i32
    %c0_i32_1 = arith.constant 0 : i32
    return %c0_i32, %c0_i32_0 : i32, i32
  }
  func.func @transform_3(%arg0: i32) -> (i32, i32) {
    %c0_i32 = arith.constant 0 : i32
    %c0_i32_0 = arith.constant 0 : i32
    %c0_i32_1 = arith.constant 0 : i32
    return %c0_i32, %c0_i32_0 : i32, i32
  }
  func.func @transform_4(%arg0: i32) -> (i32, i32) {
    %c0_i32 = arith.constant 0 : i32
    %c0_i32_0 = arith.constant 0 : i32
    %c0_i32_1 = arith.constant 0 : i32
    return %c0_i32, %c0_i32_0 : i32, i32
  }
  func.func @transform_5(%arg0: i32) -> (i32, i32) {
    %c0_i32 = arith.constant 0 : i32
    %c0_i32_0 = arith.constant 0 : i32
    %c0_i32_1 = arith.constant 0 : i32
    return %c0_i32, %c0_i32_0 : i32, i32
  }
  func.func @transform_6(%arg0: i32) -> (i32, i32) {
    %c0_i32 = arith.constant 0 : i32
    %c0_i32_0 = arith.constant 0 : i32
    %c0_i32_1 = arith.constant 0 : i32
    return %c0_i32, %c0_i32_0 : i32, i32
  }
  func.func @transform_7(%arg0: i32) -> (i32, i32) {
    %c0_i32 = arith.constant 0 : i32
    %c0_i32_0 = arith.constant 0 : i32
    %c0_i32_1 = arith.constant 0 : i32
    return %c0_i32, %c0_i32_0 : i32, i32
  }
  func.func @transform_8(%arg0: i32) -> (i32, i32) {
    %c0_i32 = arith.constant 0 : i32
    %c0_i32_0 = arith.constant 0 : i32
    %c0_i32_1 = arith.constant 0 : i32
    return %c0_i32, %c0_i32_0 : i32, i32
  }
  func.func @transform_9(%arg0: i32) -> (i32, i32) {
    %c0_i32 = arith.constant 0 : i32
    %c0_i32_0 = arith.constant 0 : i32
    return %arg0, %c0_i32 : i32, i32
  }
}

</mosaic_0001>

<llo_original>
// kernel: deepant_forward.1
$region0: #{deepant_forward.1}
  #allocation0 [shape = 'u32[]', space=smem, size = 0x4, offset = 0x4, fixed_abs, tag = 'smem constant byte address 0x4 - core index']
  #allocation1 [shape = 'u32[144,128]{1,0:T(1,128)}', space=vmem, size = 0x12000, scoped, tag = 'internal scratch']
  %s0 = inlined_call_operand.vmem [shape: f32[128,128], index: 0, kind: input, shape index: {}]
  %s1 = inlined_call_operand.vmem [shape: bf16[128,512], index: 1, kind: input, shape index: {}]
  %s2 = inlined_call_operand.vmem [shape: f32[1,256], index: 2, kind: input, shape index: {}]
  %s3 = inlined_call_operand.vmem [shape: bf16[256,256], index: 3, kind: input, shape index: {}]
  %s4 = inlined_call_operand.vmem [shape: f32[1,128], index: 4, kind: input, shape index: {}]
  %s5 = inlined_call_operand.vmem [shape: bf16[128,128], index: 5, kind: input, shape index: {}]
  %s6 = inlined_call_operand.vmem [shape: f32[1,128], index: 6, kind: input, shape index: {}]
  %s7 = inlined_call_operand.vmem [shape: bf16[128,128], index: 7, kind: input, shape index: {}]
  %s8 = inlined_call_operand.vmem [shape: f32[1,128], index: 8, kind: input, shape index: {}]
  %s9 = inlined_call_operand.vmem [shape: f32[128,128], index: 9, kind: output, shape index: {}]
  %s10 = sld [smem:[#allocation0]]
  $region46: #{deepant_forward.1} parent=0
    _
  %s12 = ssub.s32 1, %s10
  %s13 = scalar_select 0, %s12, %s10
  // Predicated region
  $region2: #{deepant_forward.1} parent=0 // pred_check
    _
  $region3: #{deepant_forward.1} parent=0 // pred_check_branch
    %15 = sbr.rel (0) target = $region5
  $region4: #{deepant_forward.1} parent=0 // pred_region
    _
  $region5: #{deepant_forward.1} parent=0 // pred_fallthru
    _
  // Predicated region
  $region6: #{deepant_forward.1} parent=0 // pred_check
    _
  $region7: #{deepant_forward.1} parent=0 // pred_check_branch
    %17 = sbr.rel (0) target = $region9
  $region8: #{deepant_forward.1} parent=0 // pred_region
    _
  $region9: #{deepant_forward.1} parent=0 // pred_fallthru
    _
  // Predicated region
  $region10: #{deepant_forward.1} parent=0 // pred_check
    _
  $region11: #{deepant_forward.1} parent=0 // pred_check_branch
    %19 = sbr.rel (0) target = $region13
  $region12: #{deepant_forward.1} parent=0 // pred_region
    _
  $region13: #{deepant_forward.1} parent=0 // pred_fallthru
    _
  // Predicated region
  $region14: #{deepant_forward.1} parent=0 // pred_check
    _
  $region15: #{deepant_forward.1} parent=0 // pred_check_branch
    %21 = sbr.rel (0) target = $region17
  $region16: #{deepant_forward.1} parent=0 // pred_region
    _
  $region17: #{deepant_forward.1} parent=0 // pred_fallthru
    _
  // Predicated region
  $region18: #{deepant_forward.1} parent=0 // pred_check
    _
  $region19: #{deepant_forward.1} parent=0 // pred_check_branch
    %23 = sbr.rel (0) target = $region21
  $region20: #{deepant_forward.1} parent=0 // pred_region
    _
  $region21: #{deepant_forward.1} parent=0 // pred_fallthru
    _
  // Predicated region
  $region22: #{deepant_forward.1} parent=0 // pred_check
    _
  $region23: #{deepant_forward.1} parent=0 // pred_check_branch
    %25 = sbr.rel (0) target = $region25
  $region24: #{deepant_forward.1} parent=0 // pred_region
    _
  $region25: #{deepant_forward.1} parent=0 // pred_fallthru
    _
  // Predicated region
  $region26: #{deepant_forward.1} parent=0 // pred_check
    _
  $region27: #{deepant_forward.1} parent=0 // pred_check_branch
    %27 = sbr.rel (0) target = $region29
  $region28: #{deepant_forward.1} parent=0 // pred_region
    _
  $region29: #{deepant_forward.1} parent=0 // pred_fallthru
    _
  // Predicated region
  $region30: #{deepant_forward.1} parent=0 // pred_check
    _
  $region31: #{deepant_forward.1} parent=0 // pred_check_branch
    %29 = sbr.rel (0) target = $region33
  $region32: #{deepant_forward.1} parent=0 // pred_region
    _
  $region33: #{deepant_forward.1} parent=0 // pred_fallthru
    _
  // Predicated region
  $region34: #{deepant_forward.1} parent=0 // pred_check
    _
  $region35: #{deepant_forward.1} parent=0 // pred_check_branch
    %31 = sbr.rel (0) target = $region37
  $region36: #{deepant_forward.1} parent=0 // pred_region
    _
  $region37: #{deepant_forward.1} parent=0 // pred_fallthru
    _
  %v33 = vld [vmem:[%s0] sm:$0xff]
  %v34 = vld [vmem:[%s0 + $0x8] sm:$0xff]
  %v35 = vld [vmem:[%s0 + $0x10] sm:$0xff]
  %v36 = vld [vmem:[%s0 + $0x18] sm:$0xff]
  %v37 = vld [vmem:[%s0 + $0x20] sm:$0xff]
  %v38 = vld [vmem:[%s0 + $0x28] sm:$0xff]
  %v39 = vld [vmem:[%s0 + $0x30] sm:$0xff]
  %v40 = vld [vmem:[%s0 + $0x38] sm:$0xff]
  %v41 = vld [vmem:[%s0 + $0x40] sm:$0xff]
  %v42 = vld [vmem:[%s0 + $0x48] sm:$0xff]
  %v43 = vld [vmem:[%s0 + $0x50] sm:$0xff]
  %v44 = vld [vmem:[%s0 + $0x58] sm:$0xff]
  %v45 = vld [vmem:[%s0 + $0x60] sm:$0xff]
  %v46 = vld [vmem:[%s0 + $0x68] sm:$0xff]
  %v47 = vld [vmem:[%s0 + $0x70] sm:$0xff]
  %v48 = vld [vmem:[%s0 + $0x78] sm:$0xff]
  %v49 = vpack.c.bf16 %v34, %v33
  %v50 = vpack.c.bf16 %v36, %v35
  %v51 = vpack.c.bf16 %v38, %v37
  %v52 = vpack.c.bf16 %v40, %v39
  %v53 = vpack.c.bf16 %v42, %v41
  %v54 = vpack.c.bf16 %v44, %v43
  %v55 = vpack.c.bf16 %v46, %v45
  %v56 = vpack.c.bf16 %v48, %v47
  %v57 = vld [vmem:[%s1] sm:$0xff]
  %v58 = vld [vmem:[%s1 + $0x8] sm:$0xff]
  %v59 = vld [vmem:[%s1 + $0x10] sm:$0xff]
  %v60 = vld [vmem:[%s1 + $0x18] sm:$0xff]
  %v61 = vld [vmem:[%s1 + $0x20] sm:$0xff]
  %v62 = vld [vmem:[%s1 + $0x28] sm:$0xff]
  %v63 = vld [vmem:[%s1 + $0x30] sm:$0xff]
  %v64 = vld [vmem:[%s1 + $0x38] sm:$0xff]
  %v65 = vld [vmem:[%s1 + $0x40] sm:$0xff]
  %v66 = vld [vmem:[%s1 + $0x48] sm:$0xff]
  %v67 = vld [vmem:[%s1 + $0x50] sm:$0xff]
  %v68 = vld [vmem:[%s1 + $0x58] sm:$0xff]
  %v69 = vld [vmem:[%s1 + $0x60] sm:$0xff]
  %v70 = vld [vmem:[%s1 + $0x68] sm:$0xff]
  %v71 = vld [vmem:[%s1 + $0x70] sm:$0xff]
  %v72 = vld [vmem:[%s1 + $0x78] sm:$0xff]
  %v73 = vld [vmem:[%s1 + $0x80] sm:$0xff]
  %v74 = vld [vmem:[%s1 + $0x88] sm:$0xff]
  %v75 = vld [vmem:[%s1 + $0x90] sm:$0xff]
  %v76 = vld [vmem:[%s1 + $0x98] sm:$0xff]
  %v77 = vld [vmem:[%s1 + $0xa0] sm:$0xff]
  %v78 = vld [vmem:[%s1 + $0xa8] sm:$0xff]
  %v79 = vld [vmem:[%s1 + $0xb0] sm:$0xff]
  %v80 = vld [vmem:[%s1 + $0xb8] sm:$0xff]
  %v81 = vld [vmem:[%s1 + $0xc0] sm:$0xff]
  %v82 = vld [vmem:[%s1 + $0xc8] sm:$0xff]
  %v83 = vld [vmem:[%s1 + $0xd0] sm:$0xff]
  %v84 = vld [vmem:[%s1 + $0xd8] sm:$0xff]
  %v85 = vld [vmem:[%s1 + $0xe0] sm:$0xff]
  %v86 = vld [vmem:[%s1 + $0xe8] sm:$0xff]
  %v87 = vld [vmem:[%s1 + $0xf0] sm:$0xff]
  %v88 = vld [vmem:[%s1 + $0xf8] sm:$0xff]
  %v121 = vunpack.c.l.b16 %v57
  %v122 = vunpack.c.h.b16 %v57
  %v123 = vunpack.c.l.b16 %v58
  %v124 = vunpack.c.h.b16 %v58
  %v125 = vunpack.c.l.b16 %v59
  %v126 = vunpack.c.h.b16 %v59
  %v127 = vunpack.c.l.b16 %v60
  %v128 = vunpack.c.h.b16 %v60
  %v129 = vunpack.c.l.b16 %v61
  %v130 = vunpack.c.h.b16 %v61
  %v131 = vunpack.c.l.b16 %v62
  %v132 = vunpack.c.h.b16 %v62
  %v133 = vunpack.c.l.b16 %v63
  %v134 = vunpack.c.h.b16 %v63
  %v135 = vunpack.c.l.b16 %v64
  %v136 = vunpack.c.h.b16 %v64
  %v137 = vunpack.c.l.b16 %v65
  %v138 = vunpack.c.h.b16 %v65
  %v139 = vunpack.c.l.b16 %v66
  %v140 = vunpack.c.h.b16 %v66
  %v141 = vunpack.c.l.b16 %v67
  %v142 = vunpack.c.h.b16 %v67
  %v143 = vunpack.c.l.b16 %v68
  %v144 = vunpack.c.h.b16 %v68
  %v145 = vunpack.c.l.b16 %v69
  %v146 = vunpack.c.h.b16 %v69
  %v147 = vunpack.c.l.b16 %v70
  %v148 = vunpack.c.h.b16 %v70
  %v149 = vunpack.c.l.b16 %v71
  %v150 = vunpack.c.h.b16 %v71
  %v151 = vunpack.c.l.b16 %v72
  %v152 = vunpack.c.h.b16 %v72
  %v153 = vunpack.c.l.b16 %v73
  %v154 = vunpack.c.h.b16 %v73
  %v155 = vunpack.c.l.b16 %v74
  %v156 = vunpack.c.h.b16 %v74
  %v157 = vunpack.c.l.b16 %v75
  %v158 = vunpack.c.h.b16 %v75
  %v159 = vunpack.c.l.b16 %v76
  %v160 = vunpack.c.h.b16 %v76
  %v161 = vunpack.c.l.b16 %v77
  %v162 = vunpack.c.h.b16 %v77
  %v163 = vunpack.c.l.b16 %v78
  %v164 = vunpack.c.h.b16 %v78
  %v165 = vunpack.c.l.b16 %v79
  %v166 = vunpack.c.h.b16 %v79
  %v167 = vunpack.c.l.b16 %v80
  %v168 = vunpack.c.h.b16 %v80
  %v169 = vunpack.c.l.b16 %v81
  %v170 = vunpack.c.h.b16 %v81
  %v171 = vunpack.c.l.b16 %v82
  %v172 = vunpack.c.h.b16 %v82
  %v173 = vunpack.c.l.b16 %v83
  %v174 = vunpack.c.h.b16 %v83
  %v175 = vunpack.c.l.b16 %v84
  %v176 = vunpack.c.h.b16 %v84
  %v177 = vunpack.c.l.b16 %v85
  %v178 = vunpack.c.h.b16 %v85
  %v179 = vunpack.c.l.b16 %v86
  %v180 = vunpack.c.h.b16 %v86
  %v181 = vunpack.c.l.b16 %v87
  %v182 = vunpack.c.h.b16 %v87
  %v183 = vunpack.c.l.b16 %v88
  %v184 = vunpack.c.h.b16 %v88
  %v185 = vpack.c.b16 %v125, %v121
  %v186 = vpack.c.b16 %v126, %v122
  %v187 = vpack.c.b16 %v127, %v123
  %v188 = vpack.c.b16 %v128, %v124
  %v189 = vpack.c.b16 %v133, %v129
  %v190 = vpack.c.b16 %v134, %v130
  %v191 = vpack.c.b16 %v135, %v131
  %v192 = vpack.c.b16 %v136, %v132
  %v193 = vpack.c.b16 %v141, %v137
  %v194 = vpack.c.b16 %v142, %v138
  %v195 = vpack.c.b16 %v143, %v139
  %v196 = vpack.c.b16 %v144, %v140
  %v197 = vpack.c.b16 %v149, %v145
  %v198 = vpack.c.b16 %v150, %v146
  %v199 = vpack.c.b16 %v151, %v147
  %v200 = vpack.c.b16 %v152, %v148
  %v201 = vpack.c.b16 %v157, %v153
  %v202 = vpack.c.b16 %v158, %v154
  %v203 = vpack.c.b16 %v159, %v155
  %v204 = vpack.c.b16 %v160, %v156
  %v205 = vpack.c.b16 %v165, %v161
  %v206 = vpack.c.b16 %v166, %v162
  %v207 = vpack.c.b16 %v167, %v163
  %v208 = vpack.c.b16 %v168, %v164
  %v209 = vpack.c.b16 %v173, %v169
  %v210 = vpack.c.b16 %v174, %v170
  %v211 = vpack.c.b16 %v175, %v171
  %v212 = vpack.c.b16 %v176, %v172
  %v213 = vpack.c.b16 %v181, %v177
  %v214 = vpack.c.b16 %v182, %v178
  %v215 = vpack.c.b16 %v183, %v179
  %v216 = vpack.c.b16 %v184, %v180
  %249 = vmatprep.subr.bf16.mxu0 %v186
  %250 = vmatpush1.bf16.msra.mxu0 %v185
  %251 = vmatprep.subr.bf16.mxu0 %v190
  %252 = vmatpush1.bf16.msra.mxu0 %v189
  %253 = vmatprep.subr.bf16.mxu0 %v194
  %254 = vmatpush1.bf16.msra.mxu0 %v193
  %255 = vmatprep.subr.bf16.mxu0 %v198
  %256 = vmatpush1.bf16.msra.mxu0 %v197
  %257 = vmatprep.subr.bf16.mxu0 %v202
  %258 = vmatpush1.bf16.msra.mxu0 %v201
  %259 = vmatprep.subr.bf16.mxu0 %v206
  %260 = vmatpush1.bf16.msra.mxu0 %v205
  %261 = vmatprep.subr.bf16.mxu0 %v210
  %262 = vmatpush1.bf16.msra.mxu0 %v209
  %263 = vmatprep.subr.bf16.mxu0 %v214
  %264 = vmatpush1.bf16.msra.mxu0 %v213
  %265 = vmatprep.subr.bf16.mxu0 0
  %266 = vmatpush1.bf16.msra.mxu0 0
  %267 = vmatprep.subr.bf16.mxu0 0
  %268 = vmatpush1.bf16.msra.mxu0 0
  %269 = vmatprep.subr.bf16.mxu0 0
  %270 = vmatpush1.bf16.msra.mxu0 0
  %271 = vmatprep.subr.bf16.mxu0 0
  %272 = vmatpush1.bf16.msra.mxu0 0
  %273 = vmatprep.subr.bf16.mxu0 0
  %274 = vmatpush1.bf16.msra.mxu0 0
  %275 = vmatprep.subr.bf16.mxu0 0
  %276 = vmatpush1.bf16.msra.mxu0 0
  %277 = vmatprep.subr.bf16.mxu0 0
  %278 = vmatpush1.bf16.msra.mxu0 0
  %279 = vmatprep.subr.bf16.mxu0 0
  %280 = vmatpush1.bf16.msra.mxu0 0
  %281 = vmatprep.mubr.bf16.mxu0 0
  %282 = vmatmul.mubr.bf16.gmra.mrb[0].mxu0 %v49
  %v283 = vpop.f32.mrb[0].mxu0
  %v284 = vadd.f32 0.0, %v283
  %v285 = vpop.f32.mrb[0].mxu0
  %v286 = vadd.f32 0.0, %v285
  %v287 = vpop.f32.mrb[0].mxu0
  %v288 = vadd.f32 0.0, %v287
  %v289 = vpop.f32.mrb[0].mxu0
  %v290 = vadd.f32 0.0, %v289
  %291 = vmatprep.mubr.bf16.mxu0 0
  %292 = vmatmul.mubr.bf16.gmra.mrb[0].mxu0 %v50
  %v293 = vpop.f32.mrb[0].mxu0
  %v294 = vadd.f32 0.0, %v293
  %v295 = vpop.f32.mrb[0].mxu0
  %v296 = vadd.f32 0.0, %v295
  %v297 = vpop.f32.mrb[0].mxu0
  %v298 = vadd.f32 0.0, %v297
  %v299 = vpop.f32.mrb[0].mxu0
  %v300 = vadd.f32 0.0, %v299
  %301 = vmatprep.mubr.bf16.mxu0 0
  %302 = vmatmul.mubr.bf16.gmra.mrb[0].mxu0 %v51
  %v303 = vpop.f32.mrb[0].mxu0
  %v304 = vadd.f32 0.0, %v303
  %v305 = vpop.f32.mrb[0].mxu0
  %v306 = vadd.f32 0.0, %v305
  %v307 = vpop.f32.mrb[0].mxu0
  %v308 = vadd.f32 0.0, %v307
  %v309 = vpop.f32.mrb[0].mxu0
  %v310 = vadd.f32 0.0, %v309
  %311 = vmatprep.mubr.bf16.mxu0 0
  %312 = vmatmul.mubr.bf16.gmra.mrb[0].mxu0 %v52
  %v313 = vpop.f32.mrb[0].mxu0
  %v314 = vadd.f32 0.0, %v313
  %v315 = vpop.f32.mrb[0].mxu0
  %v316 = vadd.f32 0.0, %v315
  %v317 = vpop.f32.mrb[0].mxu0
  %v318 = vadd.f32 0.0, %v317
  %v319 = vpop.f32.mrb[0].mxu0
  %v320 = vadd.f32 0.0, %v319
  %321 = vmatprep.mubr.bf16.mxu0 0
  %322 = vmatmul.mubr.bf16.gmra.mrb[0].mxu0 %v53
  %v323 = vpop.f32.mrb[0].mxu0
  %v324 = vadd.f32 0.0, %v323
  %v325 = vpop.f32.mrb[0].mxu0
  %v326 = vadd.f32 0.0, %v325
  %v327 = vpop.f32.mrb[0].mxu0
  %v328 = vadd.f32 0.0, %v327
  %v329 = vpop.f32.mrb[0].mxu0
  %v330 = vadd.f32 0.0, %v329
  %331 = vmatprep.mubr.bf16.mxu0 0
  %332 = vmatmul.mubr.bf16.gmra.mrb[0].mxu0 %v54
  %v333 = vpop.f32.mrb[0].mxu0
  %v334 = vadd.f32 0.0, %v333
  %v335 = vpop.f32.mrb[0].mxu0
  %v336 = vadd.f32 0.0, %v335
  %v337 = vpop.f32.mrb[0].mxu0
  %v338 = vadd.f32 0.0, %v337
  %v339 = vpop.f32.mrb[0].mxu0
  %v340 = vadd.f32 0.0, %v339
  %341 = vmatprep.mubr.bf16.mxu0 0
  %342 = vmatmul.mubr.bf16.gmra.mrb[0].mxu0 %v55
  %v343 = vpop.f32.mrb[0].mxu0
  %v344 = vadd.f32 0.0, %v343
  %v345 = vpop.f32.mrb[0].mxu0
  %v346 = vadd.f32 0.0, %v345
  %v347 = vpop.f32.mrb[0].mxu0
  %v348 = vadd.f32 0.0, %v347
  %v349 = vpop.f32.mrb[0].mxu0
  %v350 = vadd.f32 0.0, %v349
  %351 = vmatprep.mubr.bf16.mxu0 0
  %352 = vmatmul.mubr.bf16.gmra.mrb[0].mxu0 %v56
  %v353 = vpop.f32.mrb[0].mxu0
  %v354 = vadd.f32 0.0, %v353
  %v355 = vpop.f32.mrb[0].mxu0
  %v356 = vadd.f32 0.0, %v355
  %v357 = vpop.f32.mrb[0].mxu0
  %v358 = vadd.f32 0.0, %v357
  %v359 = vpop.f32.mrb[0].mxu0
  %v360 = vadd.f32 0.0, %v359
  %361 = vdwg.mxu0
  %362 = vmatprep.subr.bf16.mxu0 %v188
  %363 = vmatpush1.bf16.msra.mxu0 %v187
  %364 = vmatprep.subr.bf16.mxu0 %v192
  %365 = vmatpush1.bf16.msra.mxu0 %v191
  %366 = vmatprep.subr.bf16.mxu0 %v196
  %367 = vmatpush1.bf16.msra.mxu0 %v195
  %368 = vmatprep.subr.bf16.mxu0 %v200
  %369 = vmatpush1.bf16.msra.mxu0 %v199
  %370 = vmatprep.subr.bf16.mxu0 %v204
  %371 = vmatpush1.bf16.msra.mxu0 %v203
  %372 = vmatprep.subr.bf16.mxu0 %v208
  %373 = vmatpush1.bf16.msra.mxu0 %v207
  %374 = vmatprep.subr.bf16.mxu0 %v212
  %375 = vmatpush1.bf16.msra.mxu0 %v211
  %376 = vmatprep.subr.bf16.mxu0 %v216
  %377 = vmatpush1.bf16.msra.mxu0 %v215
  %378 = vmatprep.subr.bf16.mxu0 0
  %379 = vmatpush1.bf16.msra.mxu0 0
  %380 = vmatprep.subr.bf16.mxu0 0
  %381 = vmatpush1.bf16.msra.mxu0 0
  %382 = vmatprep.subr.bf16.mxu0 0
  %383 = vmatpush1.bf16.msra.mxu0 0
  %384 = vmatprep.subr.bf16.mxu0 0
  %385 = vmatpush1.bf16.msra.mxu0 0
  %386 = vmatprep.subr.bf16.mxu0 0
  %387 = vmatpush1.bf16.msra.mxu0 0
  %388 = vmatprep.subr.bf16.mxu0 0
  %389 = vmatpush1.bf16.msra.mxu0 0
  %390 = vmatprep.subr.bf16.mxu0 0
  %391 = vmatpush1.bf16.msra.mxu0 0
  %392 = vmatprep.subr.bf16.mxu0 0
  %393 = vmatpush1.bf16.msra.mxu0 0
  %394 = vmatprep.mubr.bf16.mxu0 0
  %395 = vmatmul.mubr.bf16.gmra.mrb[0].mxu0 %v49
  %v396 = vpop.f32.mrb[0].mxu0
  %v397 = vadd.f32 0.0, %v396
  %v398 = vpop.f32.mrb[0].mxu0
  %v399 = vadd.f32 0.0, %v398
  %v400 = vpop.f32.mrb[0].mxu0
  %v401 = vadd.f32 0.0, %v400
  %v402 = vpop.f32.mrb[0].mxu0
  %v403 = vadd.f32 0.0, %v402
  %404 = vmatprep.mubr.bf16.mxu0 0
  %405 = vmatmul.mubr.bf16.gmra.mrb[0].mxu0 %v50
  %v406 = vpop.f32.mrb[0].mxu0
  %v407 = vadd.f32 0.0, %v406
  %v408 = vpop.f32.mrb[0].mxu0
  %v409 = vadd.f32 0.0, %v408
  %v410 = vpop.f32.mrb[0].mxu0
  %v411 = vadd.f32 0.0, %v410
  %v412 = vpop.f32.mrb[0].mxu0
  %v413 = vadd.f32 0.0, %v412
  %414 = vmatprep.mubr.bf16.mxu0 0
  %415 = vmatmul.mubr.bf16.gmra.mrb[0].mxu0 %v51
  %v416 = vpop.f32.mrb[0].mxu0
  %v417 = vadd.f32 0.0, %v416
  %v418 = vpop.f32.mrb[0].mxu0
  %v419 = vadd.f32 0.0, %v418
  %v420 = vpop.f32.mrb[0].mxu0
  %v421 = vadd.f32 0.0, %v420
  %v422 = vpop.f32.mrb[0].mxu0
  %v423 = vadd.f32 0.0, %v422
  %424 = vmatprep.mubr.bf16.mxu0 0
  %425 = vmatmul.mubr.bf16.gmra.mrb[0].mxu0 %v52
  %v426 = vpop.f32.mrb[0].mxu0
  %v427 = vadd.f32 0.0, %v426
  %v428 = vpop.f32.mrb[0].mxu0
  %v429 = vadd.f32 0.0, %v428
  %v430 = vpop.f32.mrb[0].mxu0
  %v431 = vadd.f32 0.0, %v430
  %v432 = vpop.f32.mrb[0].mxu0
  %v433 = vadd.f32 0.0, %v432
  %434 = vmatprep.mubr.bf16.mxu0 0
  %435 = vmatmul.mubr.bf16.gmra.mrb[0].mxu0 %v53
  %v436 = vpop.f32.mrb[0].mxu0
  %v437 = vadd.f32 0.0, %v436
  %v438 = vpop.f32.mrb[0].mxu0
  %v439 = vadd.f32 0.0, %v438
  %v440 = vpop.f32.mrb[0].mxu0
  %v441 = vadd.f32 0.0, %v440
  %v442 = vpop.f32.mrb[0].mxu0
  %v443 = vadd.f32 0.0, %v442
  %444 = vmatprep.mubr.bf16.mxu0 0
  %445 = vmatmul.mubr.bf16.gmra.mrb[0].mxu0 %v54
  %v446 = vpop.f32.mrb[0].mxu0
  %v447 = vadd.f32 0.0, %v446
  %v448 = vpop.f32.mrb[0].mxu0
  %v449 = vadd.f32 0.0, %v448
  %v450 = vpop.f32.mrb[0].mxu0
  %v451 = vadd.f32 0.0, %v450
  %v452 = vpop.f32.mrb[0].mxu0
  %v453 = vadd.f32 0.0, %v452
  %454 = vmatprep.mubr.bf16.mxu0 0
  %455 = vmatmul.mubr.bf16.gmra.mrb[0].mxu0 %v55
  %v456 = vpop.f32.mrb[0].mxu0
  %v457 = vadd.f32 0.0, %v456
  %v458 = vpop.f32.mrb[0].mxu0
  %v459 = vadd.f32 0.0, %v458
  %v460 = vpop.f32.mrb[0].mxu0
  %v461 = vadd.f32 0.0, %v460
  %v462 = vpop.f32.mrb[0].mxu0
  %v463 = vadd.f32 0.0, %v462
  %464 = vmatprep.mubr.bf16.mxu0 0
  %465 = vmatmul.mubr.bf16.gmra.mrb[0].mxu0 %v56
  %v466 = vpop.f32.mrb[0].mxu0
  %v467 = vadd.f32 0.0, %v466
  %v468 = vpop.f32.mrb[0].mxu0
  %v469 = vadd.f32 0.0, %v468
  %v470 = vpop.f32.mrb[0].mxu0
  %v471 = vadd.f32 0.0, %v470
  %v472 = vpop.f32.mrb[0].mxu0
  %v473 = vadd.f32 0.0, %v472
  %474 = vdwg.mxu0
  %v475 = vmax.f32 %v284, %v397
  %v476 = vmax.f32 %v286, %v399
  %v477 = vmax.f32 %v288, %v401
  %v478 = vmax.f32 %v290, %v403
  %v479 = vmax.f32 %v294, %v407
  %v480 = vmax.f32 %v296, %v409
  %v481 = vmax.f32 %v298, %v411
  %v482 = vmax.f32 %v300, %v413
  %v483 = vmax.f32 %v304, %v417
  %v484 = vmax.f32 %v306, %v419
  %v485 = vmax.f32 %v308, %v421
  %v486 = vmax.f32 %v310, %v423
  %v487 = vmax.f32 %v314, %v427
  %v488 = vmax.f32 %v316, %v429
  %v489 = vmax.f32 %v318, %v431
  %v490 = vmax.f32 %v320, %v433
  %v491 = vmax.f32 %v324, %v437
  %v492 = vmax.f32 %v326, %v439
  %v493 = vmax.f32 %v328, %v441
  %v494 = vmax.f32 %v330, %v443
  %v495 = vmax.f32 %v334, %v447
  %v496 = vmax.f32 %v336, %v449
  %v497 = vmax.f32 %v338, %v451
  %v498 = vmax.f32 %v340, %v453
  %v499 = vmax.f32 %v344, %v457
  %v500 = vmax.f32 %v346, %v459
  %v501 = vmax.f32 %v348, %v461
  %v502 = vmax.f32 %v350, %v463
  %v503 = vmax.f32 %v354, %v467
  %v504 = vmax.f32 %v356, %v469
  %v505 = vmax.f32 %v358, %v471
  %v506 = vmax.f32 %v360, %v473
  %v507 = vld [vmem:[%s2] sm:$0x3]
  %v509 = vlaneseq
  %v510 = vshrl.u32 %v509, 7
  %v511 = vsub.s32 0, %v510
  %v512 = vrot.slane %v507, %v511
  %v513 = vlaneseq
  %v514 = vshrl.u32 %v513, 7
  %v515 = vsub.s32 1, %v514
  %v516 = vrot.slane %v507, %v515
  %v519 = vadd.f32 %v475, %v512
  %v520 = vadd.f32 %v476, %v516
  %v521 = vadd.f32 %v477, %v512
  %v522 = vadd.f32 %v478, %v516
  %v523 = vadd.f32 %v479, %v512
  %v524 = vadd.f32 %v480, %v516
  %v525 = vadd.f32 %v481, %v512
  %v526 = vadd.f32 %v482, %v516
  %v527 = vadd.f32 %v483, %v512
  %v528 = vadd.f32 %v484, %v516
  %v529 = vadd.f32 %v485, %v512
  %v530 = vadd.f32 %v486, %v516
  %v531 = vadd.f32 %v487, %v512
  %v532 = vadd.f32 %v488, %v516
  %v533 = vadd.f32 %v489, %v512
  %v534 = vadd.f32 %v490, %v516
  %v535 = vadd.f32 %v491, %v512
  %v536 = vadd.f32 %v492, %v516
  %v537 = vadd.f32 %v493, %v512
  %v538 = vadd.f32 %v494, %v516
  %v539 = vadd.f32 %v495, %v512
  %v540 = vadd.f32 %v496, %v516
  %v541 = vadd.f32 %v497, %v512
  %v542 = vadd.f32 %v498, %v516
  %v543 = vadd.f32 %v499, %v512
  %v544 = vadd.f32 %v500, %v516
  %v545 = vadd.f32 %v501, %v512
  %v546 = vadd.f32 %v502, %v516
  %v547 = vadd.f32 %v503, %v512
  %v548 = vadd.f32 %v504, %v516
  %v549 = vadd.f32 %v505, %v512
  %v550 = vadd.f32 %v506, %v516
  %v551 = vmax.f32 %v519, 0.0
  %v552 = vmax.f32 %v520, 0.0
  %v553 = vmax.f32 %v521, 0.0
  %v554 = vmax.f32 %v522, 0.0
  %v555 = vmax.f32 %v523, 0.0
  %v556 = vmax.f32 %v524, 0.0
  %v557 = vmax.f32 %v525, 0.0
  %v558 = vmax.f32 %v526, 0.0
  %v559 = vmax.f32 %v527, 0.0
  %v560 = vmax.f32 %v528, 0.0
  %v561 = vmax.f32 %v529, 0.0
  %v562 = vmax.f32 %v530, 0.0
  %v563 = vmax.f32 %v531, 0.0
  %v564 = vmax.f32 %v532, 0.0
  %v565 = vmax.f32 %v533, 0.0
  %v566 = vmax.f32 %v534, 0.0
  %v567 = vmax.f32 %v535, 0.0
  %v568 = vmax.f32 %v536, 0.0
  %v569 = vmax.f32 %v537, 0.0
  %v570 = vmax.f32 %v538, 0.0
  %v571 = vmax.f32 %v539, 0.0
  %v572 = vmax.f32 %v540, 0.0
  %v573 = vmax.f32 %v541, 0.0
  %v574 = vmax.f32 %v542, 0.0
  %v575 = vmax.f32 %v543, 0.0
  %v576 = vmax.f32 %v544, 0.0
  %v577 = vmax.f32 %v545, 0.0
  %v578 = vmax.f32 %v546, 0.0
  %v579 = vmax.f32 %v547, 0.0
  %v580 = vmax.f32 %v548, 0.0
  %v581 = vmax.f32 %v549, 0.0
  %v582 = vmax.f32 %v550, 0.0
  %v583 = vpack.c.bf16 %v553, %v551
  %v584 = vpack.c.bf16 %v554, %v552
  %v585 = vpack.c.bf16 %v557, %v555
  %v586 = vpack.c.bf16 %v558, %v556
  %v587 = vpack.c.bf16 %v561, %v559
  %v588 = vpack.c.bf16 %v562, %v560
  %v589 = vpack.c.bf16 %v565, %v563
  %v590 = vpack.c.bf16 %v566, %v564
  %v591 = vpack.c.bf16 %v569, %v567
  %v592 = vpack.c.bf16 %v570, %v568
  %v593 = vpack.c.bf16 %v573, %v571
  %v594 = vpack.c.bf16 %v574, %v572
  %v595 = vpack.c.bf16 %v577, %v575
  %v596 = vpack.c.bf16 %v578, %v576
  %v597 = vpack.c.bf16 %v581, %v579
  %v598 = vpack.c.bf16 %v582, %v580
  %v599 = vld [vmem:[%s3] sm:$0xff]
  %v600 = vld [vmem:[%s3 + $0x8] sm:$0xff]
  %v601 = vld [vmem:[%s3 + $0x10] sm:$0xff]
  %v602 = vld [vmem:[%s3 + $0x18] sm:$0xff]
  %v603 = vld [vmem:[%s3 + $0x20] sm:$0xff]
  %v604 = vld [vmem:[%s3 + $0x28] sm:$0xff]
  %v605 = vld [vmem:[%s3 + $0x30] sm:$0xff]
  %v606 = vld [vmem:[%s3 + $0x38] sm:$0xff]
  %v607 = vld [vmem:[%s3 + $0x40] sm:$0xff]
  %v608 = vld [vmem:[%s3 + $0x48] sm:$0xff]
  %v609 = vld [vmem:[%s3 + $0x50] sm:$0xff]
  %v610 = vld [vmem:[%s3 + $0x58] sm:$0xff]
  %v611 = vld [vmem:[%s3 + $0x60] sm:$0xff]
  %v612 = vld [vmem:[%s3 + $0x68] sm:$0xff]
  %v613 = vld [vmem:[%s3 + $0x70] sm:$0xff]
  %v614 = vld [vmem:[%s3 + $0x78] sm:$0xff]
  %v615 = vld [vmem:[%s3 + $0x80] sm:$0xff]
  %v616 = vld [vmem:[%s3 + $0x88] sm:$0xff]
  %v617 = vld [vmem:[%s3 + $0x90] sm:$0xff]
  %v618 = vld [vmem:[%s3 + $0x98] sm:$0xff]
  %v619 = vld [vmem:[%s3 + $0xa0] sm:$0xff]
  %v620 = vld [vmem:[%s3 + $0xa8] sm:$0xff]
  %v621 = vld [vmem:[%s3 + $0xb0] sm:$0xff]
  %v622 = vld [vmem:[%s3 + $0xb8] sm:$0xff]
  %v623 = vld [vmem:[%s3 + $0xc0] sm:$0xff]
  %v624 = vld [vmem:[%s3 + $0xc8] sm:$0xff]
  %v625 = vld [vmem:[%s3 + $0xd0] sm:$0xff]
  %v626 = vld [vmem:[%s3 + $0xd8] sm:$0xff]
  %v627 = vld [vmem:[%s3 + $0xe0] sm:$0xff]
  %v628 = vld [vmem:[%s3 + $0xe8] sm:$0xff]
  %v629 = vld [vmem:[%s3 + $0xf0] sm:$0xff]
  %v630 = vld [vmem:[%s3 + $0xf8] sm:$0xff]
  %v663 = vunpack.c.l.b16 %v599
  %v664 = vunpack.c.h.b16 %v599
  %v665 = vunpack.c.l.b16 %v600
  %v666 = vunpack.c.h.b16 %v600
  %v667 = vunpack.c.l.b16 %v601
  %v668 = vunpack.c.h.b16 %v601
  %v669 = vunpack.c.l.b16 %v602
  %v670 = vunpack.c.h.b16 %v602
  %v671 = vunpack.c.l.b16 %v603
  %v672 = vunpack.c.h.b16 %v603
  %v673 = vunpack.c.l.b16 %v604
  %v674 = vunpack.c.h.b16 %v604
  %v675 = vunpack.c.l.b16 %v605
  %v676 = vunpack.c.h.b16 %v605
  %v677 = vunpack.c.l.b16 %v606
  %v678 = vunpack.c.h.b16 %v606
  %v679 = vunpack.c.l.b16 %v607
  %v680 = vunpack.c.h.b16 %v607
  %v681 = vunpack.c.l.b16 %v608
  %v682 = vunpack.c.h.b16 %v608
  %v683 = vunpack.c.l.b16 %v609
  %v684 = vunpack.c.h.b16 %v609
  %v685 = vunpack.c.l.b16 %v610
  %v686 = vunpack.c.h.b16 %v610
  %v687 = vunpack.c.l.b16 %v611
  %v688 = vunpack.c.h.b16 %v611
  %v689 = vunpack.c.l.b16 %v612
  %v690 = vunpack.c.h.b16 %v612
  %v691 = vunpack.c.l.b16 %v613
  %v692 = vunpack.c.h.b16 %v613
  %v693 = vunpack.c.l.b16 %v614
  %v694 = vunpack.c.h.b16 %v614
  %v695 = vunpack.c.l.b16 %v615
  %v696 = vunpack.c.h.b16 %v615
  %v697 = vunpack.c.l.b16 %v616
  %v698 = vunpack.c.h.b16 %v616
  %v699 = vunpack.c.l.b16 %v617
  %v700 = vunpack.c.h.b16 %v617
  %v701 = vunpack.c.l.b16 %v618
  %v702 = vunpack.c.h.b16 %v618
  %v703 = vunpack.c.l.b16 %v619
  %v704 = vunpack.c.h.b16 %v619
  %v705 = vunpack.c.l.b16 %v620
  %v706 = vunpack.c.h.b16 %v620
  %v707 = vunpack.c.l.b16 %v621
  %v708 = vunpack.c.h.b16 %v621
  %v709 = vunpack.c.l.b16 %v622
  %v710 = vunpack.c.h.b16 %v622
  %v711 = vunpack.c.l.b16 %v623
  %v712 = vunpack.c.h.b16 %v623
  %v713 = vunpack.c.l.b16 %v624
  %v714 = vunpack.c.h.b16 %v624
  %v715 = vunpack.c.l.b16 %v625
  %v716 = vunpack.c.h.b16 %v625
  %v717 = vunpack.c.l.b16 %v626
  %v718 = vunpack.c.h.b16 %v626
  %v719 = vunpack.c.l.b16 %v627
  %v720 = vunpack.c.h.b16 %v627
  %v721 = vunpack.c.l.b16 %v628
  %v722 = vunpack.c.h.b16 %v628
  %v723 = vunpack.c.l.b16 %v629
  %v724 = vunpack.c.h.b16 %v629
  %v725 = vunpack.c.l.b16 %v630
  %v726 = vunpack.c.h.b16 %v630
  %v727 = vpack.c.b16 %v665, %v663
  %v728 = vpack.c.b16 %v666, %v664
  %v729 = vpack.c.b16 %v669, %v667
  %v730 = vpack.c.b16 %v670, %v668
  %v731 = vpack.c.b16 %v673, %v671
  %v732 = vpack.c.b16 %v674, %v672
  %v733 = vpack.c.b16 %v677, %v675
  %v734 = vpack.c.b16 %v678, %v676
  %v735 = vpack.c.b16 %v681, %v679
  %v736 = vpack.c.b16 %v682, %v680
  %v737 = vpack.c.b16 %v685, %v683
  %v738 = vpack.c.b16 %v686, %v684
  %v739 = vpack.c.b16 %v689, %v687
  %v740 = vpack.c.b16 %v690, %v688
  %v741 = vpack.c.b16 %v693, %v691
  %v742 = vpack.c.b16 %v694, %v692
  %v743 = vpack.c.b16 %v697, %v695
  %v744 = vpack.c.b16 %v698, %v696
  %v745 = vpack.c.b16 %v701, %v699
  %v746 = vpack.c.b16 %v702, %v700
  %v747 = vpack.c.b16 %v705, %v703
  %v748 = vpack.c.b16 %v706, %v704
  %v749 = vpack.c.b16 %v709, %v707
  %v750 = vpack.c.b16 %v710, %v708
  %v751 = vpack.c.b16 %v713, %v711
  %v752 = vpack.c.b16 %v714, %v712
  %v753 = vpack.c.b16 %v717, %v715
  %v754 = vpack.c.b16 %v718, %v716
  %v755 = vpack.c.b16 %v721, %v719
  %v756 = vpack.c.b16 %v722, %v720
  %v757 = vpack.c.b16 %v725, %v723
  %v758 = vpack.c.b16 %v726, %v724
  %791 = vmatprep.subr.bf16.mxu0 %v728
  %792 = vmatpush1.bf16.msra.mxu0 %v727
  %793 = vmatprep.subr.bf16.mxu0 %v730
  %794 = vmatpush1.bf16.msra.mxu0 %v729
  %795 = vmatprep.subr.bf16.mxu0 %v732
  %796 = vmatpush1.bf16.msra.mxu0 %v731
  %797 = vmatprep.subr.bf16.mxu0 %v734
  %798 = vmatpush1.bf16.msra.mxu0 %v733
  %799 = vmatprep.subr.bf16.mxu0 %v736
  %800 = vmatpush1.bf16.msra.mxu0 %v735
  %801 = vmatprep.subr.bf16.mxu0 %v738
  %802 = vmatpush1.bf16.msra.mxu0 %v737
  %803 = vmatprep.subr.bf16.mxu0 %v740
  %804 = vmatpush1.bf16.msra.mxu0 %v739
  %805 = vmatprep.subr.bf16.mxu0 %v742
  %806 = vmatpush1.bf16.msra.mxu0 %v741
  %807 = vmatprep.subr.bf16.mxu0 %v744
  %808 = vmatpush1.bf16.msra.mxu0 %v743
  %809 = vmatprep.subr.bf16.mxu0 %v746
  %810 = vmatpush1.bf16.msra.mxu0 %v745
  %811 = vmatprep.subr.bf16.mxu0 %v748
  %812 = vmatpush1.bf16.msra.mxu0 %v747
  %813 = vmatprep.subr.bf16.mxu0 %v750
  %814 = vmatpush1.bf16.msra.mxu0 %v749
  %815 = vmatprep.subr.bf16.mxu0 %v752
  %816 = vmatpush1.bf16.msra.mxu0 %v751
  %817 = vmatprep.subr.bf16.mxu0 %v754
  %818 = vmatpush1.bf16.msra.mxu0 %v753
  %819 = vmatprep.subr.bf16.mxu0 %v756
  %820 = vmatpush1.bf16.msra.mxu0 %v755
  %821 = vmatprep.subr.bf16.mxu0 %v758
  %822 = vmatpush1.bf16.msra.mxu0 %v757
  %823 = vmatprep.mubr.bf16.mxu0 %v584
  %824 = vmatmul.mubr.bf16.gmra.mrb[0].mxu0 %v583
  %v825 = vpop.f32.mrb[0].mxu0
  %v826 = vadd.f32 0.0, %v825
  %v827 = vpop.f32.mrb[0].mxu0
  %v828 = vadd.f32 0.0, %v827
  %v829 = vpop.f32.mrb[0].mxu0
  %v830 = vadd.f32 0.0, %v829
  %v831 = vpop.f32.mrb[0].mxu0
  %v832 = vadd.f32 0.0, %v831
  %833 = vmatprep.mubr.bf16.mxu0 %v586
  %834 = vmatmul.mubr.bf16.gmra.mrb[0].mxu0 %v585
  %v835 = vpop.f32.mrb[0].mxu0
  %v836 = vadd.f32 0.0, %v835
  %v837 = vpop.f32.mrb[0].mxu0
  %v838 = vadd.f32 0.0, %v837
  %v839 = vpop.f32.mrb[0].mxu0
  %v840 = vadd.f32 0.0, %v839
  %v841 = vpop.f32.mrb[0].mxu0
  %v842 = vadd.f32 0.0, %v841
  %843 = vmatprep.mubr.bf16.mxu0 %v588
  %844 = vmatmul.mubr.bf16.gmra.mrb[0].mxu0 %v587
  %v845 = vpop.f32.mrb[0].mxu0
  %v846 = vadd.f32 0.0, %v845
  %v847 = vpop.f32.mrb[0].mxu0
  %v848 = vadd.f32 0.0, %v847
  %v849 = vpop.f32.mrb[0].mxu0
  %v850 = vadd.f32 0.0, %v849
  %v851 = vpop.f32.mrb[0].mxu0
  %v852 = vadd.f32 0.0, %v851
  %853 = vmatprep.mubr.bf16.mxu0 %v590
  %854 = vmatmul.mubr.bf16.gmra.mrb[0].mxu0 %v589
  %v855 = vpop.f32.mrb[0].mxu0
  %v856 = vadd.f32 0.0, %v855
  %v857 = vpop.f32.mrb[0].mxu0
  %v858 = vadd.f32 0.0, %v857
  %v859 = vpop.f32.mrb[0].mxu0
  %v860 = vadd.f32 0.0, %v859
  %v861 = vpop.f32.mrb[0].mxu0
  %v862 = vadd.f32 0.0, %v861
  %863 = vmatprep.mubr.bf16.mxu0 %v592
  %864 = vmatmul.mubr.bf16.gmra.mrb[0].mxu0 %v591
  %v865 = vpop.f32.mrb[0].mxu0
  %v866 = vadd.f32 0.0, %v865
  %v867 = vpop.f32.mrb[0].mxu0
  %v868 = vadd.f32 0.0, %v867
  %v869 = vpop.f32.mrb[0].mxu0
  %v870 = vadd.f32 0.0, %v869
  %v871 = vpop.f32.mrb[0].mxu0
  %v872 = vadd.f32 0.0, %v871
  %873 = vmatprep.mubr.bf16.mxu0 %v594
  %874 = vmatmul.mubr.bf16.gmra.mrb[0].mxu0 %v593
  %v875 = vpop.f32.mrb[0].mxu0
  %v876 = vadd.f32 0.0, %v875
  %v877 = vpop.f32.mrb[0].mxu0
  %v878 = vadd.f32 0.0, %v877
  %v879 = vpop.f32.mrb[0].mxu0
  %v880 = vadd.f32 0.0, %v879
  %v881 = vpop.f32.mrb[0].mxu0
  %v882 = vadd.f32 0.0, %v881
  %883 = vmatprep.mubr.bf16.mxu0 %v596
  %884 = vmatmul.mubr.bf16.gmra.mrb[0].mxu0 %v595
  %v885 = vpop.f32.mrb[0].mxu0
  %v886 = vadd.f32 0.0, %v885
  %v887 = vpop.f32.mrb[0].mxu0
  %v888 = vadd.f32 0.0, %v887
  %v889 = vpop.f32.mrb[0].mxu0
  %v890 = vadd.f32 0.0, %v889
  %v891 = vpop.f32.mrb[0].mxu0
  %v892 = vadd.f32 0.0, %v891
  %893 = vmatprep.mubr.bf16.mxu0 %v598
  %894 = vmatmul.mubr.bf16.gmra.mrb[0].mxu0 %v597
  %v895 = vpop.f32.mrb[0].mxu0
  %v896 = vadd.f32 0.0, %v895
  %v897 = vpop.f32.mrb[0].mxu0
  %v898 = vadd.f32 0.0, %v897
  %v899 = vpop.f32.mrb[0].mxu0
  %v900 = vadd.f32 0.0, %v899
  %v901 = vpop.f32.mrb[0].mxu0
  %v902 = vadd.f32 0.0, %v901
  %903 = vdwg.mxu0
  %v904 = vmax.f32 %v826, %v828
  %v905 = vmax.f32 %v830, %v832
  %v906 = vmax.f32 %v836, %v838
  %v907 = vmax.f32 %v840, %v842
  %v908 = vmax.f32 %v846, %v848
  %v909 = vmax.f32 %v850, %v852
  %v910 = vmax.f32 %v856, %v858
  %v911 = vmax.f32 %v860, %v862
  %v912 = vmax.f32 %v866, %v868
  %v913 = vmax.f32 %v870, %v872
  %v914 = vmax.f32 %v876, %v878
  %v915 = vmax.f32 %v880, %v882
  %v916 = vmax.f32 %v886, %v888
  %v917 = vmax.f32 %v890, %v892
  %v918 = vmax.f32 %v896, %v898
  %v919 = vmax.f32 %v900, %v902
  %v920 = vld [vmem:[%s4] sm:$0x1]
  %v922 = vlaneseq
  %v923 = vshrl.u32 %v922, 7
  %v924 = vsub.s32 0, %v923
  %v925 = vrot.slane %v920, %v924
  %v927 = vadd.f32 %v904, %v925
  %v928 = vadd.f32 %v905, %v925
  %v929 = vadd.f32 %v906, %v925
  %v930 = vadd.f32 %v907, %v925
  %v931 = vadd.f32 %v908, %v925
  %v932 = vadd.f32 %v909, %v925
  %v933 = vadd.f32 %v910, %v925
  %v934 = vadd.f32 %v911, %v925
  %v935 = vadd.f32 %v912, %v925
  %v936 = vadd.f32 %v913, %v925
  %v937 = vadd.f32 %v914, %v925
  %v938 = vadd.f32 %v915, %v925
  %v939 = vadd.f32 %v916, %v925
  %v940 = vadd.f32 %v917, %v925
  %v941 = vadd.f32 %v918, %v925
  %v942 = vadd.f32 %v919, %v925
  %v943 = vmax.f32 %v927, 0.0
  %v944 = vmax.f32 %v928, 0.0
  %v945 = vmax.f32 %v929, 0.0
  %v946 = vmax.f32 %v930, 0.0
  %v947 = vmax.f32 %v931, 0.0
  %v948 = vmax.f32 %v932, 0.0
  %v949 = vmax.f32 %v933, 0.0
  %v950 = vmax.f32 %v934, 0.0
  %v951 = vmax.f32 %v935, 0.0
  %v952 = vmax.f32 %v936, 0.0
  %v953 = vmax.f32 %v937, 0.0
  %v954 = vmax.f32 %v938, 0.0
  %v955 = vmax.f32 %v939, 0.0
  %v956 = vmax.f32 %v940, 0.0
  %v957 = vmax.f32 %v941, 0.0
  %v958 = vmax.f32 %v942, 0.0
  %v959 = vpack.c.bf16 %v944, %v943
  %v960 = vpack.c.bf16 %v946, %v945
  %v961 = vpack.c.bf16 %v948, %v947
  %v962 = vpack.c.bf16 %v950, %v949
  %v963 = vpack.c.bf16 %v952, %v951
  %v964 = vpack.c.bf16 %v954, %v953
  %v965 = vpack.c.bf16 %v956, %v955
  %v966 = vpack.c.bf16 %v958, %v957
  %v967 = vld [vmem:[%s5] sm:$0xf]
  %v968 = vld [vmem:[%s5 + $0x4] sm:$0xf]
  %v969 = vld [vmem:[%s5 + $0x8] sm:$0xf]
  %v970 = vld [vmem:[%s5 + $0xc] sm:$0xf]
  %v971 = vld [vmem:[%s5 + $0x10] sm:$0xf]
  %v972 = vld [vmem:[%s5 + $0x14] sm:$0xf]
  %v973 = vld [vmem:[%s5 + $0x18] sm:$0xf]
  %v974 = vld [vmem:[%s5 + $0x1c] sm:$0xf]
  %v975 = vld [vmem:[%s5 + $0x20] sm:$0xf]
  %v976 = vld [vmem:[%s5 + $0x24] sm:$0xf]
  %v977 = vld [vmem:[%s5 + $0x28] sm:$0xf]
  %v978 = vld [vmem:[%s5 + $0x2c] sm:$0xf]
  %v979 = vld [vmem:[%s5 + $0x30] sm:$0xf]
  %v980 = vld [vmem:[%s5 + $0x34] sm:$0xf]
  %v981 = vld [vmem:[%s5 + $0x38] sm:$0xf]
  %v982 = vld [vmem:[%s5 + $0x3c] sm:$0xf]
  %v983 = vld [vmem:[%s6] sm:$0x1]
  %v985 = vlaneseq
  %v986 = vshrl.u32 %v985, 7
  %v987 = vsub.s32 0, %v986
  %v988 = vrot.slane %v983, %v987
  %v1006 = vunpack.c.l.b16 %v967
  %v1007 = vunpack.c.l.b16 %v968
  %v1008 = vunpack.c.l.b16 %v969
  %v1009 = vunpack.c.l.b16 %v970
  %v1010 = vunpack.c.l.b16 %v971
  %v1011 = vunpack.c.l.b16 %v972
  %v1012 = vunpack.c.l.b16 %v973
  %v1013 = vunpack.c.l.b16 %v974
  %v1014 = vunpack.c.l.b16 %v975
  %v1015 = vunpack.c.l.b16 %v976
  %v1016 = vunpack.c.l.b16 %v977
  %v1017 = vunpack.c.l.b16 %v978
  %v1018 = vunpack.c.l.b16 %v979
  %v1019 = vunpack.c.l.b16 %v980
  %v1020 = vunpack.c.l.b16 %v981
  %v1021 = vunpack.c.l.b16 %v982
  %v1022 = vpack.c.b16 %v1007, %v1006
  %v1023 = vpack.c.b16 %v1009, %v1008
  %v1024 = vpack.c.b16 %v1011, %v1010
  %v1025 = vpack.c.b16 %v1013, %v1012
  %v1026 = vpack.c.b16 %v1015, %v1014
  %v1027 = vpack.c.b16 %v1017, %v1016
  %v1028 = vpack.c.b16 %v1019, %v1018
  %v1029 = vpack.c.b16 %v1021, %v1020
  %1038 = vmatprep.subr.bf16.mxu0 0
  %1039 = vmatpush1.bf16.msra.mxu0 %v1022
  %1040 = vmatprep.subr.bf16.mxu0 0
  %1041 = vmatpush1.bf16.msra.mxu0 %v1023
  %1042 = vmatprep.subr.bf16.mxu0 0
  %1043 = vmatpush1.bf16.msra.mxu0 %v1024
  %1044 = vmatprep.subr.bf16.mxu0 0
  %1045 = vmatpush1.bf16.msra.mxu0 %v1025
  %1046 = vmatprep.subr.bf16.mxu0 0
  %1047 = vmatpush1.bf16.msra.mxu0 %v1026
  %1048 = vmatprep.subr.bf16.mxu0 0
  %1049 = vmatpush1.bf16.msra.mxu0 %v1027
  %1050 = vmatprep.subr.bf16.mxu0 0
  %1051 = vmatpush1.bf16.msra.mxu0 %v1028
  %1052 = vmatprep.subr.bf16.mxu0 0
  %1053 = vmatpush1.bf16.msra.mxu0 %v1029
  %1054 = vmatprep.subr.bf16.mxu0 0
  %1055 = vmatpush1.bf16.msra.mxu0 0
  %1056 = vmatprep.subr.bf16.mxu0 0
  %1057 = vmatpush1.bf16.msra.mxu0 0
  %1058 = vmatprep.subr.bf16.mxu0 0
  %1059 = vmatpush1.bf16.msra.mxu0 0
  %1060 = vmatprep.subr.bf16.mxu0 0
  %1061 = vmatpush1.bf16.msra.mxu0 0
  %1062 = vmatprep.subr.bf16.mxu0 0
  %1063 = vmatpush1.bf16.msra.mxu0 0
  %1064 = vmatprep.subr.bf16.mxu0 0
  %1065 = vmatpush1.bf16.msra.mxu0 0
  %1066 = vmatprep.subr.bf16.mxu0 0
  %1067 = vmatpush1.bf16.msra.mxu0 0
  %1068 = vmatprep.subr.bf16.mxu0 0
  %1069 = vmatpush1.bf16.msra.mxu0 0
  %1070 = vmatprep.mubr.bf16.mxu0 0
  %1071 = vmatmul.mubr.bf16.gmra.mrb[0].mxu0 %v959
  %v1072 = vpop.f32.mrb[0].mxu0
  %v1073 = vadd.f32 %v988, %v1072
  %v1074 = vpop.f32.mrb[0].mxu0
  %v1075 = vpop.f32.mrb[0].mxu0
  %v1076 = vadd.f32 %v988, %v1075
  %v1077 = vpop.f32.mrb[0].mxu0
  %1078 = vmatprep.mubr.bf16.mxu0 0
  %1079 = vmatmul.mubr.bf16.gmra.mrb[0].mxu0 %v960
  %v1080 = vpop.f32.mrb[0].mxu0
  %v1081 = vadd.f32 %v988, %v1080
  %v1082 = vpop.f32.mrb[0].mxu0
  %v1083 = vpop.f32.mrb[0].mxu0
  %v1084 = vadd.f32 %v988, %v1083
  %v1085 = vpop.f32.mrb[0].mxu0
  %1086 = vmatprep.mubr.bf16.mxu0 0
  %1087 = vmatmul.mubr.bf16.gmra.mrb[0].mxu0 %v961
  %v1088 = vpop.f32.mrb[0].mxu0
  %v1089 = vadd.f32 %v988, %v1088
  %v1090 = vpop.f32.mrb[0].mxu0
  %v1091 = vpop.f32.mrb[0].mxu0
  %v1092 = vadd.f32 %v988, %v1091
  %v1093 = vpop.f32.mrb[0].mxu0
  %1094 = vmatprep.mubr.bf16.mxu0 0
  %1095 = vmatmul.mubr.bf16.gmra.mrb[0].mxu0 %v962
  %v1096 = vpop.f32.mrb[0].mxu0
  %v1097 = vadd.f32 %v988, %v1096
  %v1098 = vpop.f32.mrb[0].mxu0
  %v1099 = vpop.f32.mrb[0].mxu0
  %v1100 = vadd.f32 %v988, %v1099
  %v1101 = vpop.f32.mrb[0].mxu0
  %1102 = vmatprep.mubr.bf16.mxu0 0
  %1103 = vmatmul.mubr.bf16.gmra.mrb[0].mxu0 %v963
  %v1104 = vpop.f32.mrb[0].mxu0
  %v1105 = vadd.f32 %v988, %v1104
  %v1106 = vpop.f32.mrb[0].mxu0
  %v1107 = vpop.f32.mrb[0].mxu0
  %v1108 = vadd.f32 %v988, %v1107
  %v1109 = vpop.f32.mrb[0].mxu0
  %1110 = vmatprep.mubr.bf16.mxu0 0
  %1111 = vmatmul.mubr.bf16.gmra.mrb[0].mxu0 %v964
  %v1112 = vpop.f32.mrb[0].mxu0
  %v1113 = vadd.f32 %v988, %v1112
  %v1114 = vpop.f32.mrb[0].mxu0
  %v1115 = vpop.f32.mrb[0].mxu0
  %v1116 = vadd.f32 %v988, %v1115
  %v1117 = vpop.f32.mrb[0].mxu0
  %1118 = vmatprep.mubr.bf16.mxu0 0
  %1119 = vmatmul.mubr.bf16.gmra.mrb[0].mxu0 %v965
  %v1120 = vpop.f32.mrb[0].mxu0
  %v1121 = vadd.f32 %v988, %v1120
  %v1122 = vpop.f32.mrb[0].mxu0
  %v1123 = vpop.f32.mrb[0].mxu0
  %v1124 = vadd.f32 %v988, %v1123
  %v1125 = vpop.f32.mrb[0].mxu0
  %1126 = vmatprep.mubr.bf16.mxu0 0
  %1127 = vmatmul.mubr.bf16.gmra.mrb[0].mxu0 %v966
  %v1128 = vpop.f32.mrb[0].mxu0
  %v1129 = vadd.f32 %v988, %v1128
  %v1130 = vpop.f32.mrb[0].mxu0
  %v1131 = vpop.f32.mrb[0].mxu0
  %v1132 = vadd.f32 %v988, %v1131
  %v1133 = vpop.f32.mrb[0].mxu0
  %1134 = vdwg.mxu0
  %v1135 = vmax.f32 %v1073, 0.0
  %v1136 = vmax.f32 %v1076, 0.0
  %v1137 = vmax.f32 %v1081, 0.0
  %v1138 = vmax.f32 %v1084, 0.0
  %v1139 = vmax.f32 %v1089, 0.0
  %v1140 = vmax.f32 %v1092, 0.0
  %v1141 = vmax.f32 %v1097, 0.0
  %v1142 = vmax.f32 %v1100, 0.0
  %v1143 = vmax.f32 %v1105, 0.0
  %v1144 = vmax.f32 %v1108, 0.0
  %v1145 = vmax.f32 %v1113, 0.0
  %v1146 = vmax.f32 %v1116, 0.0
  %v1147 = vmax.f32 %v1121, 0.0
  %v1148 = vmax.f32 %v1124, 0.0
  %v1149 = vmax.f32 %v1129, 0.0
  %v1150 = vmax.f32 %v1132, 0.0
  %v1151 = vpack.c.bf16 %v1136, %v1135
  %v1152 = vpack.c.bf16 %v1138, %v1137
  %v1153 = vpack.c.bf16 %v1140, %v1139
  %v1154 = vpack.c.bf16 %v1142, %v1141
  %v1155 = vpack.c.bf16 %v1144, %v1143
  %v1156 = vpack.c.bf16 %v1146, %v1145
  %v1157 = vpack.c.bf16 %v1148, %v1147
  %v1158 = vpack.c.bf16 %v1150, %v1149
  %v1159 = vld [vmem:[%s7] sm:$0xf]
  %v1160 = vld [vmem:[%s7 + $0x4] sm:$0xf]
  %v1161 = vld [vmem:[%s7 + $0x8] sm:$0xf]
  %v1162 = vld [vmem:[%s7 + $0xc] sm:$0xf]
  %v1163 = vld [vmem:[%s7 + $0x10] sm:$0xf]
  %v1164 = vld [vmem:[%s7 + $0x14] sm:$0xf]
  %v1165 = vld [vmem:[%s7 + $0x18] sm:$0xf]
  %v1166 = vld [vmem:[%s7 + $0x1c] sm:$0xf]
  %v1167 = vld [vmem:[%s7 + $0x20] sm:$0xf]
  %v1168 = vld [vmem:[%s7 + $0x24] sm:$0xf]
  %v1169 = vld [vmem:[%s7 + $0x28] sm:$0xf]
  %v1170 = vld [vmem:[%s7 + $0x2c] sm:$0xf]
  %v1171 = vld [vmem:[%s7 + $0x30] sm:$0xf]
  %v1172 = vld [vmem:[%s7 + $0x34] sm:$0xf]
  %v1173 = vld [vmem:[%s7 + $0x38] sm:$0xf]
  %v1174 = vld [vmem:[%s7 + $0x3c] sm:$0xf]
  %v1175 = vld [vmem:[%s8] sm:$0x1]
  %v1177 = vlaneseq
  %v1178 = vshrl.u32 %v1177, 7
  %v1179 = vsub.s32 0, %v1178
  %v1180 = vrot.slane %v1175, %v1179
  %v1198 = vunpack.c.l.b16 %v1159
  %v1199 = vunpack.c.l.b16 %v1160
  %v1200 = vunpack.c.l.b16 %v1161
  %v1201 = vunpack.c.l.b16 %v1162
  %v1202 = vunpack.c.l.b16 %v1163
  %v1203 = vunpack.c.l.b16 %v1164
  %v1204 = vunpack.c.l.b16 %v1165
  %v1205 = vunpack.c.l.b16 %v1166
  %v1206 = vunpack.c.l.b16 %v1167
  %v1207 = vunpack.c.l.b16 %v1168
  %v1208 = vunpack.c.l.b16 %v1169
  %v1209 = vunpack.c.l.b16 %v1170
  %v1210 = vunpack.c.l.b16 %v1171
  %v1211 = vunpack.c.l.b16 %v1172
  %v1212 = vunpack.c.l.b16 %v1173
  %v1213 = vunpack.c.l.b16 %v1174
  %v1214 = vpack.c.b16 %v1199, %v1198
  %v1215 = vpack.c.b16 %v1201, %v1200
  %v1216 = vpack.c.b16 %v1203, %v1202
  %v1217 = vpack.c.b16 %v1205, %v1204
  %v1218 = vpack.c.b16 %v1207, %v1206
  %v1219 = vpack.c.b16 %v1209, %v1208
  %v1220 = vpack.c.b16 %v1211, %v1210
  %v1221 = vpack.c.b16 %v1213, %v1212
  %1230 = vmatprep.subr.bf16.mxu0 0
  %1231 = vmatpush1.bf16.msra.mxu0 %v1214
  %1232 = vmatprep.subr.bf16.mxu0 0
  %1233 = vmatpush1.bf16.msra.mxu0 %v1215
  %1234 = vmatprep.subr.bf16.mxu0 0
  %1235 = vmatpush1.bf16.msra.mxu0 %v1216
  %1236 = vmatprep.subr.bf16.mxu0 0
  %1237 = vmatpush1.bf16.msra.mxu0 %v1217
  %1238 = vmatprep.subr.bf16.mxu0 0
  %1239 = vmatpush1.bf16.msra.mxu0 %v1218
  %1240 = vmatprep.subr.bf16.mxu0 0
  %1241 = vmatpush1.bf16.msra.mxu0 %v1219
  %1242 = vmatprep.subr.bf16.mxu0 0
  %1243 = vmatpush1.bf16.msra.mxu0 %v1220
  %1244 = vmatprep.subr.bf16.mxu0 0
  %1245 = vmatpush1.bf16.msra.mxu0 %v1221
  %1246 = vmatprep.subr.bf16.mxu0 0
  %1247 = vmatpush1.bf16.msra.mxu0 0
  %1248 = vmatprep.subr.bf16.mxu0 0
  %1249 = vmatpush1.bf16.msra.mxu0 0
  %1250 = vmatprep.subr.bf16.mxu0 0
  %1251 = vmatpush1.bf16.msra.mxu0 0
  %1252 = vmatprep.subr.bf16.mxu0 0
  %1253 = vmatpush1.bf16.msra.mxu0 0
  %1254 = vmatprep.subr.bf16.mxu0 0
  %1255 = vmatpush1.bf16.msra.mxu0 0
  %1256 = vmatprep.subr.bf16.mxu0 0
  %1257 = vmatpush1.bf16.msra.mxu0 0
  %1258 = vmatprep.subr.bf16.mxu0 0
  %1259 = vmatpush1.bf16.msra.mxu0 0
  %1260 = vmatprep.subr.bf16.mxu0 0
  %1261 = vmatpush1.bf16.msra.mxu0 0
  %1262 = vmatprep.mubr.bf16.mxu0 0
  %1263 = vmatmul.mubr.bf16.gmra.mrb[0].mxu0 %v1151
  %v1264 = vpop.f32.mrb[0].mxu0
  %v1265 = vadd.f32 %v1180, %v1264
  %v1266 = vpop.f32.mrb[0].mxu0
  %v1267 = vpop.f32.mrb[0].mxu0
  %v1268 = vadd.f32 %v1180, %v1267
  %v1269 = vpop.f32.mrb[0].mxu0
  %1270 = vmatprep.mubr.bf16.mxu0 0
  %1271 = vmatmul.mubr.bf16.gmra.mrb[0].mxu0 %v1152
  %v1272 = vpop.f32.mrb[0].mxu0
  %v1273 = vadd.f32 %v1180, %v1272
  %v1274 = vpop.f32.mrb[0].mxu0
  %v1275 = vpop.f32.mrb[0].mxu0
  %v1276 = vadd.f32 %v1180, %v1275
  %v1277 = vpop.f32.mrb[0].mxu0
  %1278 = vmatprep.mubr.bf16.mxu0 0
  %1279 = vmatmul.mubr.bf16.gmra.mrb[0].mxu0 %v1153
  %v1280 = vpop.f32.mrb[0].mxu0
  %v1281 = vadd.f32 %v1180, %v1280
  %v1282 = vpop.f32.mrb[0].mxu0
  %v1283 = vpop.f32.mrb[0].mxu0
  %v1284 = vadd.f32 %v1180, %v1283
  %v1285 = vpop.f32.mrb[0].mxu0
  %1286 = vmatprep.mubr.bf16.mxu0 0
  %1287 = vmatmul.mubr.bf16.gmra.mrb[0].mxu0 %v1154
  %v1288 = vpop.f32.mrb[0].mxu0
  %v1289 = vadd.f32 %v1180, %v1288
  %v1290 = vpop.f32.mrb[0].mxu0
  %v1291 = vpop.f32.mrb[0].mxu0
  %v1292 = vadd.f32 %v1180, %v1291
  %v1293 = vpop.f32.mrb[0].mxu0
  %1294 = vmatprep.mubr.bf16.mxu0 0
  %1295 = vmatmul.mubr.bf16.gmra.mrb[0].mxu0 %v1155
  %v1296 = vpop.f32.mrb[0].mxu0
  %v1297 = vadd.f32 %v1180, %v1296
  %v1298 = vpop.f32.mrb[0].mxu0
  %v1299 = vpop.f32.mrb[0].mxu0
  %v1300 = vadd.f32 %v1180, %v1299
  %v1301 = vpop.f32.mrb[0].mxu0
  %1302 = vmatprep.mubr.bf16.mxu0 0
  %1303 = vmatmul.mubr.bf16.gmra.mrb[0].mxu0 %v1156
  %v1304 = vpop.f32.mrb[0].mxu0
  %v1305 = vadd.f32 %v1180, %v1304
  %v1306 = vpop.f32.mrb[0].mxu0
  %v1307 = vpop.f32.mrb[0].mxu0
  %v1308 = vadd.f32 %v1180, %v1307
  %v1309 = vpop.f32.mrb[0].mxu0
  %1310 = vmatprep.mubr.bf16.mxu0 0
  %1311 = vmatmul.mubr.bf16.gmra.mrb[0].mxu0 %v1157
  %v1312 = vpop.f32.mrb[0].mxu0
  %v1313 = vadd.f32 %v1180, %v1312
  %v1314 = vpop.f32.mrb[0].mxu0
  %v1315 = vpop.f32.mrb[0].mxu0
  %v1316 = vadd.f32 %v1180, %v1315
  %v1317 = vpop.f32.mrb[0].mxu0
  %1318 = vmatprep.mubr.bf16.mxu0 0
  %1319 = vmatmul.mubr.bf16.gmra.mrb[0].mxu0 %v1158
  %v1320 = vpop.f32.mrb[0].mxu0
  %v1321 = vadd.f32 %v1180, %v1320
  %v1322 = vpop.f32.mrb[0].mxu0
  %v1323 = vpop.f32.mrb[0].mxu0
  %v1324 = vadd.f32 %v1180, %v1323
  %v1325 = vpop.f32.mrb[0].mxu0
  %1326 = vdwg.mxu0
  %1327 = vst [vmem:[%s9] sm:$0xff] %v1265
  %1328 = vst [vmem:[%s9 + $0x8] sm:$0xff] %v1268
  %1329 = vst [vmem:[%s9 + $0x10] sm:$0xff] %v1273
  %1330 = vst [vmem:[%s9 + $0x18] sm:$0xff] %v1276
  %1331 = vst [vmem:[%s9 + $0x20] sm:$0xff] %v1281
  %1332 = vst [vmem:[%s9 + $0x28] sm:$0xff] %v1284
  %1333 = vst [vmem:[%s9 + $0x30] sm:$0xff] %v1289
  %1334 = vst [vmem:[%s9 + $0x38] sm:$0xff] %v1292
  %1335 = vst [vmem:[%s9 + $0x40] sm:$0xff] %v1297
  %1336 = vst [vmem:[%s9 + $0x48] sm:$0xff] %v1300
  %1337 = vst [vmem:[%s9 + $0x50] sm:$0xff] %v1305
  %1338 = vst [vmem:[%s9 + $0x58] sm:$0xff] %v1308
  %1339 = vst [vmem:[%s9 + $0x60] sm:$0xff] %v1313
  %1340 = vst [vmem:[%s9 + $0x68] sm:$0xff] %v1316
  %1341 = vst [vmem:[%s9 + $0x70] sm:$0xff] %v1321
  %1342 = vst [vmem:[%s9 + $0x78] sm:$0xff] %v1324
  // Predicated region
  $region38: #{deepant_forward.1} parent=0 // pred_check
    _
  $region39: #{deepant_forward.1} parent=0 // pred_check_branch
    %1344 = sbr.rel (0) target = $region41
  $region40: #{deepant_forward.1} parent=0 // pred_region
    _
  $region41: #{deepant_forward.1} parent=0 // pred_fallthru
    _
  // Predicated region
  $region42: #{deepant_forward.1} parent=0 // pred_check
    _
  $region43: #{deepant_forward.1} parent=0 // pred_check_branch
    %1346 = sbr.rel (0) target = $region45
  $region44: #{deepant_forward.1} parent=0 // pred_region
    _
  $region45: #{deepant_forward.1} parent=0 // pred_fallthru
    _

</llo_original>
